<compile_context>
chip_gen: v7x
topology: tpu7x:2x2x1
jax: 0.10.0
libtpu: 0.0.40
codegen_flags: <defaults>
</compile_context>

<pallas_src>
import functools

import jax
import jax.numpy as jnp
from jax.experimental import pallas as pl
from jax.experimental.pallas import tpu as pltpu

HIDDEN = 30
LANE = 128                 # TPU lane width: pad the action dim to this
DEFAULT_BLOCK_B = 8192     # one grid step for any realistic DQN batch


def _round_up(x, m):
    return ((x + m - 1) // m) * m


def _mlp_kernel(x_ref, w1_ref, b1_ref, w2_ref, b2_ref, out_ref):
    # x:  (tile_b, in)    w1: (in, 30)      b1: (1, 30)
    # w2: (30, A_pad)     b2: (1, A_pad)    out: (tile_b, A_pad)   A_pad = 128
    x = x_ref[...]
    if x.dtype != jnp.float32:            # trace-time check: free when already f32
        x = x.astype(jnp.float32)

    # fc1: x @ W1 + b1, ReLU   (weights already transposed -> no in-kernel .T)
    h = jnp.dot(x, w1_ref[...], preferred_element_type=jnp.float32) + b1_ref[...]
    h = jnp.maximum(h, 0.0)

    # fc2: h @ W2 + b2  (lane-padded to 128 -> unmasked, lane-dense store)
    q = jnp.dot(h, w2_ref[...], preferred_element_type=jnp.float32) + b2_ref[...]
    out_ref[...] = q.astype(out_ref.dtype)


def prepare_params(w1, b1, w2, b2, lane_pad=LANE):
    """One-time conversion from PyTorch layout to the kernel layout.

    W1:(30,in) -> (in,30); b1 -> (1,30);
    W2:(A,30)  -> (30,A) zero-padded to (30,lane_pad); b2 -> (1,lane_pad).
    Do this once at parameter-creation time so the per-call path has zero
    reshape/transpose/pad work.
    """
    w1t = jnp.asarray(w1, jnp.float32).T                 # (in, 30)
    b1r = jnp.asarray(b1, jnp.float32).reshape(1, -1)    # (1, 30)
    w2t = jnp.asarray(w2, jnp.float32).T                 # (30, A)
    b2r = jnp.asarray(b2, jnp.float32).reshape(1, -1)    # (1, A)

    nb_action = w2t.shape[1]
    a_pad = _round_up(max(nb_action, 1), lane_pad)       # -> 128 for A=3
    if a_pad != nb_action:
        w2t = jnp.pad(w2t, ((0, 0), (0, a_pad - nb_action)))
        b2r = jnp.pad(b2r, ((0, 0), (0, a_pad - nb_action)))
    return (w1t, b1r, w2t, b2r)


@functools.partial(jax.jit, static_argnames=("nb_action", "block_b"))
def network_forward(state, params, nb_action, block_b=DEFAULT_BLOCK_B):
    """Fused forward pass: relu(state @ W1^T + b1) @ W2^T + b2.

    `params` must come from `prepare_params` (pre-transposed, lane-padded).
    `nb_action` is static (number of valid output columns before padding).
    """
    w1t, b1r, w2p, b2p = params
    batch, in_dim = state.shape
    a_pad = w2p.shape[1]

    # Enforce a sublane-aligned batch tile; default is one grid step.
    block_b = max(8, _round_up(block_b, 8))
    tile_b = min(block_b, _round_up(batch, 8))
    padded_b = _round_up(batch, tile_b)
    if padded_b != batch:                 # skipped for multiple-of-8 batches
        state = jnp.pad(state, ((0, padded_b - batch), (0, 0)))

    grid = (padded_b // tile_b,)

    out = pl.pallas_call(
        _mlp_kernel,
        out_shape=jax.ShapeDtypeStruct((padded_b, a_pad), jnp.float32),
        grid_spec=pltpu.PrefetchScalarGridSpec(
            num_scalar_prefetch=0,
            grid=grid,
            in_specs=[
                # Batch-tiled activations.
                pl.BlockSpec((tile_b, in_dim), lambda i: (i, 0)),
                # Weights/biases: full blocks, resident in VMEM across the grid.
                pl.BlockSpec(w1t.shape, lambda i: (0, 0)),
                pl.BlockSpec(b1r.shape, lambda i: (0, 0)),
                pl.BlockSpec(w2p.shape, lambda i: (0, 0)),
                pl.BlockSpec(b2p.shape, lambda i: (0, 0)),
            ],
            out_specs=pl.BlockSpec((tile_b, a_pad), lambda i: (i, 0)),
        ),
        compiler_params=pltpu.CompilerParams(
            # Grid is usually (1,); when a huge eval batch does tile, the
            # blocks are independent so v7x can shard them across TCs.
            dimension_semantics=("parallel",),
        ),
    )(state, w1t, b1r, w2p, b2p)

    # Drop batch padding and lane padding.
    return out[:batch, :nb_action]


def init_params(key, input_size, nb_action, hidden=HIDDEN, dtype=jnp.float32):
    """Deterministic init mimicking nn.Linear's uniform(-1/sqrt(fan_in), 1/sqrt(fan_in))."""
    k1, k2, k3, k4 = jax.random.split(key, 4)
    bound1 = 1.0 / jnp.sqrt(jnp.array(input_size, dtype))
    bound2 = 1.0 / jnp.sqrt(jnp.array(hidden, dtype))
    w1 = jax.random.uniform(k1, (hidden, input_size), dtype, -bound1, bound1)
    b1 = jax.random.uniform(k2, (hidden,), dtype, -bound1, bound1)
    w2 = jax.random.uniform(k3, (nb_action, hidden), dtype, -bound2, bound2)
    b2 = jax.random.uniform(k4, (nb_action,), dtype, -bound2, bound2)
    return w1, b1, w2, b2


def reference_forward(state, w1, b1, w2, b2):
    h = jnp.maximum(state @ w1.T + b1, 0.0)
    return h @ w2.T + b2


if __name__ == "__main__":
    key = jax.random.PRNGKey(0)
    k_params, k_s1, k_s2 = jax.random.split(key, 3)

    # Shapes consistent with the module: the DQN in this repo uses
    # input_size=5 (sensor signals + orientation), nb_action=3.
    input_size, nb_action = 5, 3

    w1, b1, w2, b2 = init_params(k_params, input_size, nb_action)
    params = prepare_params(w1, b1, w2, b2)   # one-time transpose + lane-pad

    # Case 1: tiny inference-style batch (single grid step, no batch pad).
    state_small = jax.random.normal(k_s1, (8, input_size), jnp.float32)
    q_small = network_forward(state_small, params, nb_action)
    jax.block_until_ready(q_small)
    ref_small = reference_forward(state_small, w1, b1, w2, b2)
    assert q_small.shape == (8, nb_action)
    assert jnp.allclose(q_small, ref_small, atol=1e-5, rtol=1e-5)

    # Case 2: replay-style batch that is not a multiple of 8 (exercises the
    # batch-padding path; still a single grid step).
    state_big = jax.random.normal(k_s2, (100, input_size), jnp.float32)
    q_big = network_forward(state_big, params, nb_action)
    jax.block_until_ready(q_big)
    ref_big = reference_forward(state_big, w1, b1, w2, b2)
    assert q_big.shape == (100, nb_action)
    assert jnp.allclose(q_big, ref_big, atol=1e-5, rtol=1e-5)

    # Case 3: odd user-supplied block_b (exercises the multiple-of-8 rounding
    # of the batch tile and a multi-step grid).
    q_blk = network_forward(state_big, params, nb_action, block_b=100)
    jax.block_until_ready(q_blk)
    assert jnp.allclose(q_blk, ref_big, atol=1e-5, rtol=1e-5)

    print("KERNEL_OK")
</pallas_src>

<mosaic_0001>
module attributes {stable_mosaic.version = 11 : i64} {
  func.func @_mlp_kernel(%arg0: i32, %arg1: memref<8x5xf32, #tpu.memory_space<vmem>>, %arg2: memref<5x30xf32, #tpu.memory_space<vmem>>, %arg3: memref<1x30xf32, #tpu.memory_space<vmem>>, %arg4: memref<30x128xf32, #tpu.memory_space<vmem>>, %arg5: memref<1x128xf32, #tpu.memory_space<vmem>>, %arg6: memref<8x128xf32, #tpu.memory_space<vmem>>) attributes {dimension_semantics = [#tpu.dimension_semantics<parallel>], iteration_bounds = array<i64: 1>, scalar_prefetch = 0 : i64, scratch_operands = 0 : i64, tpu.core_type = #tpu.core_type<tc>, window_params = [{transform_indices = @transform_0, window_bounds = array<i64: 8, 5>}, {pipeline_mode = #tpu.pipeline_mode<synchronous>, transform_indices = @transform_1, window_bounds = array<i64: 5, 30>}, {pipeline_mode = #tpu.pipeline_mode<synchronous>, transform_indices = @transform_2, window_bounds = array<i64: 1, 30>}, {pipeline_mode = #tpu.pipeline_mode<synchronous>, transform_indices = @transform_3, window_bounds = array<i64: 30, 128>}, {pipeline_mode = #tpu.pipeline_mode<synchronous>, transform_indices = @transform_4, window_bounds = array<i64: 1, 128>}, {transform_indices = @transform_5, window_bounds = array<i64: 8, 128>}]} {
    %c0 = arith.constant 0 : index
    %c0_0 = arith.constant 0 : index
    %0 = vector.load %arg1[%c0, %c0_0] : memref<8x5xf32, #tpu.memory_space<vmem>>, vector<8x5xf32>
    %c0_1 = arith.constant 0 : index
    %c0_2 = arith.constant 0 : index
    %1 = vector.load %arg2[%c0_1, %c0_2] : memref<5x30xf32, #tpu.memory_space<vmem>>, vector<5x30xf32>
    %cst = arith.constant dense<0.000000e+00> : vector<8x30xf32>
    %2 = tpu.matmul %0, %1, %cst {dimension_numbers = #tpu.dot_dimension_numbers<[1], [0], [0], [1], [0, 0, 1, 1], [], []>} : vector<8x5xf32>, vector<5x30xf32>, vector<8x30xf32> -> vector<8x30xf32>
    %c0_3 = arith.constant 0 : index
    %c0_4 = arith.constant 0 : index
    %3 = vector.load %arg3[%c0_3, %c0_4] : memref<1x30xf32, #tpu.memory_space<vmem>>, vector<1x30xf32>
    %4 = vector.broadcast %3 : vector<1x30xf32> to vector<8x30xf32>
    %5 = arith.addf %2, %4 : vector<8x30xf32>
    %cst_5 = arith.constant 0.000000e+00 : f32
    %6 = vector.broadcast %cst_5 : f32 to vector<8x30xf32>
    %7 = arith.maximumf %5, %6 : vector<8x30xf32>
    %c0_6 = arith.constant 0 : index
    %c0_7 = arith.constant 0 : index
    %8 = vector.load %arg4[%c0_6, %c0_7] : memref<30x128xf32, #tpu.memory_space<vmem>>, vector<30x128xf32>
    %cst_8 = arith.constant dense<0.000000e+00> : vector<8x128xf32>
    %9 = tpu.matmul %7, %8, %cst_8 {dimension_numbers = #tpu.dot_dimension_numbers<[1], [0], [0], [1], [0, 0, 1, 1], [], []>} : vector<8x30xf32>, vector<30x128xf32>, vector<8x128xf32> -> vector<8x128xf32>
    %c0_9 = arith.constant 0 : index
    %c0_10 = arith.constant 0 : index
    %10 = vector.load %arg5[%c0_9, %c0_10] : memref<1x128xf32, #tpu.memory_space<vmem>>, vector<1x128xf32>
    %11 = vector.broadcast %10 : vector<1x128xf32> to vector<8x128xf32>
    %12 = arith.addf %9, %11 : vector<8x128xf32>
    %c0_11 = arith.constant 0 : index
    %c0_12 = arith.constant 0 : index
    %13 = vector.load %arg6[%c0_11, %c0_12] : memref<8x128xf32, #tpu.memory_space<vmem>>, vector<8x128xf32>
    tpu.vector_store %arg6[%c0_11, %c0_12], %12 {strides = array<i32>} : memref<8x128xf32, #tpu.memory_space<vmem>>, vector<8x128xf32>,
    return
  }
  func.func @transform_0(%arg0: i32) -> (i32, i32) {
    %c0_i32 = arith.constant 0 : i32
    %c0_i32_0 = arith.constant 0 : i32
    return %arg0, %c0_i32 : i32, i32
  }
  func.func @transform_1(%arg0: i32) -> (i32, i32) {
    %c0_i32 = arith.constant 0 : i32
    %c0_i32_0 = arith.constant 0 : i32
    %c0_i32_1 = arith.constant 0 : i32
    return %c0_i32, %c0_i32_0 : i32, i32
  }
  func.func @transform_2(%arg0: i32) -> (i32, i32) {
    %c0_i32 = arith.constant 0 : i32
    %c0_i32_0 = arith.constant 0 : i32
    %c0_i32_1 = arith.constant 0 : i32
    return %c0_i32, %c0_i32_0 : i32, i32
  }
  func.func @transform_3(%arg0: i32) -> (i32, i32) {
    %c0_i32 = arith.constant 0 : i32
    %c0_i32_0 = arith.constant 0 : i32
    %c0_i32_1 = arith.constant 0 : i32
    return %c0_i32, %c0_i32_0 : i32, i32
  }
  func.func @transform_4(%arg0: i32) -> (i32, i32) {
    %c0_i32 = arith.constant 0 : i32
    %c0_i32_0 = arith.constant 0 : i32
    %c0_i32_1 = arith.constant 0 : i32
    return %c0_i32, %c0_i32_0 : i32, i32
  }
  func.func @transform_5(%arg0: i32) -> (i32, i32) {
    %c0_i32 = arith.constant 0 : i32
    %c0_i32_0 = arith.constant 0 : i32
    return %arg0, %c0_i32 : i32, i32
  }
}

</mosaic_0001>

<llo_original>
// kernel: network_forward.1
$region0: #{network_forward.1}
  #allocation0 [shape = 'u32[]', space=smem, size = 0x4, offset = 0x4, fixed_abs, tag = 'smem constant byte address 0x4 - core index']
  #allocation1 [shape = 'u32[144,128]{1,0:T(1,128)}', space=vmem, size = 0x12000, scoped, tag = 'internal scratch']
  %s0 = inlined_call_operand.hbm [shape: f32[8,5], index: 0, kind: input, shape index: {}]
  %s1 = inlined_call_operand.hbm [shape: f32[5,30], index: 1, kind: input, shape index: {}]
  %s2 = inlined_call_operand.vmem [shape: f32[1,30], index: 2, kind: input, shape index: {}]
  %s3 = inlined_call_operand.hbm [shape: f32[30,128], index: 3, kind: input, shape index: {}]
  %s4 = inlined_call_operand.vmem [shape: f32[1,128], index: 4, kind: input, shape index: {}]
  %s5 = inlined_call_operand.vmem [shape: f32[8,128], index: 5, kind: output, shape index: {}]
  %s6 = sld [smem:[#allocation0]]
  $region42: #{network_forward.1} parent=0
    _
  %s8 = ssub.s32 1, %s6
  %s9 = scalar_select 0, %s8, %s6
  $region1: #{network_forward.1} parent=0
    #allocation2 [shape = 'u8[4096]{0}', space=vmem, size = 0x1000, scoped, tag = 'input window, operand 0, single buffered']
    #allocation3 [shape = 's32[1]{0}', space=sflag, size = 0x4, scoped, tag = 'scoped memory for network_forward.1']
    #allocation4 [shape = 'u8[4096]{0}', space=vmem, size = 0x1000, scoped, tag = 'input window, operand 1, single buffered']
    #allocation5 [shape = 's32[1]{0}', space=sflag, size = 0x4, scoped, tag = 'scoped memory for network_forward.1']
    #allocation6 [shape = 'u8[16384]{0}', space=vmem, size = 0x4000, scoped, tag = 'input window, operand 3, single buffered']
    %10 = vsyncpa [#allocation3], 0
    %11 = vsyncpa [#allocation5], 0
    // Predicated region
    $region2: #{network_forward.1} parent=1 // pred_check
      _
    $region3: #{network_forward.1} parent=1 // pred_check_branch
      %13 = sbr.rel (0) target = $region5
    $region4: #{network_forward.1} parent=1 // pred_region
      %s15 = ssub.s32 128, 128
      %16 = vsyncadd [#allocation3], %s15
      %s18 = sshll.u32 [#allocation2], 4
      %s19 = int_to_ptr.vmem [resolvable:$true] %s18
      %21 = dma.hbm_to_vmem [thread:$0]  %s0, 128, %s19, [#allocation3]
    $region5: #{network_forward.1} parent=1 // pred_fallthru
      _
    // Predicated region
    $region6: #{network_forward.1} parent=1 // pred_check
      _
    $region7: #{network_forward.1} parent=1 // pred_check_branch
      %23 = sbr.rel (0) target = $region9
    $region8: #{network_forward.1} parent=1 // pred_region
      %s25 = ssub.s32 128, 128
      %26 = vsyncadd [#allocation5], %s25
      %s28 = sshll.u32 [#allocation4], 4
      %s29 = int_to_ptr.vmem [resolvable:$true] %s28
      %31 = dma.hbm_to_vmem [thread:$0]  %s1, 128, %s29, [#allocation5]
    $region9: #{network_forward.1} parent=1 // pred_fallthru
      _
    // Predicated region
    $region10: #{network_forward.1} parent=1 // pred_check
      _
    $region11: #{network_forward.1} parent=1 // pred_check_branch
      %33 = sbr.rel (0) target = $region13
    $region12: #{network_forward.1} parent=1 // pred_region
      _
    $region13: #{network_forward.1} parent=1 // pred_fallthru
      _
    // Predicated region
    $region14: #{network_forward.1} parent=1 // pred_check
      _
    $region15: #{network_forward.1} parent=1 // pred_check_branch
      %35 = sbr.rel (0) target = $region17
    $region16: #{network_forward.1} parent=1 // pred_region
      %s37 = ssub.s32 512, 512
      %38 = vsyncadd [#allocation5], %s37
      %s39 = sshll.u32 [#allocation6], 4
      %s40 = int_to_ptr.vmem [resolvable:$true] %s39
      %45 = dma.hbm_to_vmem [thread:$0]  %s3, 512, %s40, [#allocation5], 128, 128, 8
    $region17: #{network_forward.1} parent=1 // pred_fallthru
      _
    // Predicated region
    $region18: #{network_forward.1} parent=1 // pred_check
      _
    $region19: #{network_forward.1} parent=1 // pred_check_branch
      %47 = sbr.rel (0) target = $region21
    $region20: #{network_forward.1} parent=1 // pred_region
      _
    $region21: #{network_forward.1} parent=1 // pred_fallthru
      _
    // Predicated region
    $region22: #{network_forward.1} parent=1 // pred_check
      _
    $region23: #{network_forward.1} parent=1 // pred_check_branch
      %49 = sbr.rel (0) target = $region25
    $region24: #{network_forward.1} parent=1 // pred_region
      %50 = dma.done [#allocation3], 128
    $region25: #{network_forward.1} parent=1 // pred_fallthru
      _
    // Predicated region
    $region26: #{network_forward.1} parent=1 // pred_check
      _
    $region27: #{network_forward.1} parent=1 // pred_check_branch
      %52 = sbr.rel (0) target = $region29
    $region28: #{network_forward.1} parent=1 // pred_region
      %53 = dma.done [#allocation5], 128
    $region29: #{network_forward.1} parent=1 // pred_fallthru
      _
    // Predicated region
    $region30: #{network_forward.1} parent=1 // pred_check
      _
    $region31: #{network_forward.1} parent=1 // pred_check_branch
      %55 = sbr.rel (0) target = $region33
    $region32: #{network_forward.1} parent=1 // pred_region
      %56 = dma.done [#allocation5], 512
    $region33: #{network_forward.1} parent=1 // pred_fallthru
      _
    %v57 = vld [vmem:[#allocation2] sm:$0xff]
    %v58 = vld [vmem:[#allocation4] sm:$0x1f]
    %v59 = vld [vmem:[%s2] sm:$0x1]
    %v61 = vlaneseq
    %v62 = vshrl.u32 %v61, 7
    %v63 = vsub.s32 0, %v62
    %v64 = vrot.slane %v59, %v63
    %vm66 = vcmask 39936
    %v68 = vsel %vm66, %v57, 0
    %vm70 = vcmask 1044480
    %v72 = vsel %vm70, %v58, 0
    %74 = vmatprep.subr.mxu0 0.0
    %75 = vmatpush1.msra.mxu0 %v72
    %76 = vmatprep.subr.mxu0 0.0
    %77 = vmatpush1.msra.mxu0 0.0
    %78 = vmatprep.subr.mxu0 0.0
    %79 = vmatpush1.msra.mxu0 0.0
    %80 = vmatprep.subr.mxu0 0.0
    %81 = vmatpush1.msra.mxu0 0.0
    %82 = vmatprep.subr.mxu0 0.0
    %83 = vmatpush1.msra.mxu0 0.0
    %84 = vmatprep.subr.mxu0 0.0
    %85 = vmatpush1.msra.mxu0 0.0
    %86 = vmatprep.subr.mxu0 0.0
    %87 = vmatpush1.msra.mxu0 0.0
    %88 = vmatprep.subr.mxu0 0.0
    %89 = vmatpush1.msra.mxu0 0.0
    %90 = vmatprep.subr.mxu0 0.0
    %91 = vmatpush1.msra.mxu0 0.0
    %92 = vmatprep.subr.mxu0 0.0
    %93 = vmatpush1.msra.mxu0 0.0
    %94 = vmatprep.subr.mxu0 0.0
    %95 = vmatpush1.msra.mxu0 0.0
    %96 = vmatprep.subr.mxu0 0.0
    %97 = vmatpush1.msra.mxu0 0.0
    %98 = vmatprep.subr.mxu0 0.0
    %99 = vmatpush1.msra.mxu0 0.0
    %100 = vmatprep.subr.mxu0 0.0
    %101 = vmatpush1.msra.mxu0 0.0
    %102 = vmatprep.subr.mxu0 0.0
    %103 = vmatpush1.msra.mxu0 0.0
    %104 = vmatprep.subr.mxu0 0.0
    %105 = vmatpush1.msra.mxu0 0.0
    %106 = vmatprep.subr.mxu0 0.0
    %107 = vmatpush1.msra.mxu0 0.0
    %108 = vmatprep.subr.mxu0 0.0
    %109 = vmatpush1.msra.mxu0 0.0
    %110 = vmatprep.subr.mxu0 0.0
    %111 = vmatpush1.msra.mxu0 0.0
    %112 = vmatprep.subr.mxu0 0.0
    %113 = vmatpush1.msra.mxu0 0.0
    %114 = vmatprep.subr.mxu0 0.0
    %115 = vmatpush1.msra.mxu0 0.0
    %116 = vmatprep.subr.mxu0 0.0
    %117 = vmatpush1.msra.mxu0 0.0
    %118 = vmatprep.subr.mxu0 0.0
    %119 = vmatpush1.msra.mxu0 0.0
    %120 = vmatprep.subr.mxu0 0.0
    %121 = vmatpush1.msra.mxu0 0.0
    %122 = vmatprep.subr.mxu0 0.0
    %123 = vmatpush1.msra.mxu0 0.0
    %124 = vmatprep.subr.mxu0 0.0
    %125 = vmatpush1.msra.mxu0 0.0
    %126 = vmatprep.subr.mxu0 0.0
    %127 = vmatpush1.msra.mxu0 0.0
    %128 = vmatprep.subr.mxu0 0.0
    %129 = vmatpush1.msra.mxu0 0.0
    %130 = vmatprep.subr.mxu0 0.0
    %131 = vmatpush1.msra.mxu0 0.0
    %132 = vmatprep.subr.mxu0 0.0
    %133 = vmatpush1.msra.mxu0 0.0
    %134 = vmatprep.subr.mxu0 0.0
    %135 = vmatpush1.msra.mxu0 0.0
    %136 = vmatprep.subr.mxu0 0.0
    %137 = vmatpush1.msra.mxu0 0.0
    %138 = vmatprep.mubr.f32.mxu0 0.0
    %139 = vmatmul.mubr.f32.gmra.mrb[0].mxu0 %v68
    %v140 = vpop.f32.mrb[0].mxu0
    %v141 = vadd.f32 %v64, %v140
    %v142 = vpop.f32.mrb[0].mxu0
    %143 = vdwg.mxu0
    %v144 = vmax.f32 %v141, 0.0
    %v145 = vld [vmem:[#allocation6] sm:$0xff]
    %v146 = vld [vmem:[#allocation6 + $0x8] sm:$0xff]
    %v147 = vld [vmem:[#allocation6 + $0x10] sm:$0xff]
    %v148 = vld [vmem:[#allocation6 + $0x18] sm:$0x3f]
    %v149 = vld [vmem:[%s4] sm:$0x1]
    %v151 = vlaneseq
    %v152 = vshrl.u32 %v151, 7
    %v153 = vsub.s32 0, %v152
    %v154 = vrot.slane %v149, %v153
    %vm156 = vcmask 244736
    %v158 = vsel %vm156, %v144, 0
    %vm160 = vcmask 1045504
    %v162 = vsel %vm160, %v148, 0
    %164 = vmatprep.subr.mxu0 0.0
    %165 = vmatpush1.msra.mxu0 %v145
    %166 = vmatprep.subr.mxu0 0.0
    %167 = vmatpush1.msra.mxu0 %v146
    %168 = vmatprep.subr.mxu0 0.0
    %169 = vmatpush1.msra.mxu0 %v147
    %170 = vmatprep.subr.mxu0 0.0
    %171 = vmatpush1.msra.mxu0 %v162
    %172 = vmatprep.subr.mxu0 0.0
    %173 = vmatpush1.msra.mxu0 0.0
    %174 = vmatprep.subr.mxu0 0.0
    %175 = vmatpush1.msra.mxu0 0.0
    %176 = vmatprep.subr.mxu0 0.0
    %177 = vmatpush1.msra.mxu0 0.0
    %178 = vmatprep.subr.mxu0 0.0
    %179 = vmatpush1.msra.mxu0 0.0
    %180 = vmatprep.subr.mxu0 0.0
    %181 = vmatpush1.msra.mxu0 0.0
    %182 = vmatprep.subr.mxu0 0.0
    %183 = vmatpush1.msra.mxu0 0.0
    %184 = vmatprep.subr.mxu0 0.0
    %185 = vmatpush1.msra.mxu0 0.0
    %186 = vmatprep.subr.mxu0 0.0
    %187 = vmatpush1.msra.mxu0 0.0
    %188 = vmatprep.subr.mxu0 0.0
    %189 = vmatpush1.msra.mxu0 0.0
    %190 = vmatprep.subr.mxu0 0.0
    %191 = vmatpush1.msra.mxu0 0.0
    %192 = vmatprep.subr.mxu0 0.0
    %193 = vmatpush1.msra.mxu0 0.0
    %194 = vmatprep.subr.mxu0 0.0
    %195 = vmatpush1.msra.mxu0 0.0
    %196 = vmatprep.subr.mxu0 0.0
    %197 = vmatpush1.msra.mxu0 0.0
    %198 = vmatprep.subr.mxu0 0.0
    %199 = vmatpush1.msra.mxu0 0.0
    %200 = vmatprep.subr.mxu0 0.0
    %201 = vmatpush1.msra.mxu0 0.0
    %202 = vmatprep.subr.mxu0 0.0
    %203 = vmatpush1.msra.mxu0 0.0
    %204 = vmatprep.subr.mxu0 0.0
    %205 = vmatpush1.msra.mxu0 0.0
    %206 = vmatprep.subr.mxu0 0.0
    %207 = vmatpush1.msra.mxu0 0.0
    %208 = vmatprep.subr.mxu0 0.0
    %209 = vmatpush1.msra.mxu0 0.0
    %210 = vmatprep.subr.mxu0 0.0
    %211 = vmatpush1.msra.mxu0 0.0
    %212 = vmatprep.subr.mxu0 0.0
    %213 = vmatpush1.msra.mxu0 0.0
    %214 = vmatprep.subr.mxu0 0.0
    %215 = vmatpush1.msra.mxu0 0.0
    %216 = vmatprep.subr.mxu0 0.0
    %217 = vmatpush1.msra.mxu0 0.0
    %218 = vmatprep.subr.mxu0 0.0
    %219 = vmatpush1.msra.mxu0 0.0
    %220 = vmatprep.subr.mxu0 0.0
    %221 = vmatpush1.msra.mxu0 0.0
    %222 = vmatprep.subr.mxu0 0.0
    %223 = vmatpush1.msra.mxu0 0.0
    %224 = vmatprep.subr.mxu0 0.0
    %225 = vmatpush1.msra.mxu0 0.0
    %226 = vmatprep.subr.mxu0 0.0
    %227 = vmatpush1.msra.mxu0 0.0
    %228 = vmatprep.mubr.f32.mxu0 0.0
    %229 = vmatmul.mubr.f32.gmra.mrb[0].mxu0 %v158
    %v230 = vpop.f32.mrb[0].mxu0
    %v231 = vadd.f32 %v154, %v230
    %v232 = vpop.f32.mrb[0].mxu0
    %233 = vdwg.mxu0
    %234 = vst [vmem:[%s5] sm:$0xff] %v231
    // Predicated region
    $region34: #{network_forward.1} parent=1 // pred_check
      _
    $region35: #{network_forward.1} parent=1 // pred_check_branch
      %236 = sbr.rel (0) target = $region37
    $region36: #{network_forward.1} parent=1 // pred_region
      _
    $region37: #{network_forward.1} parent=1 // pred_fallthru
      _
    // Predicated region
    $region38: #{network_forward.1} parent=1 // pred_check
      _
    $region39: #{network_forward.1} parent=1 // pred_check_branch
      %238 = sbr.rel (0) target = $region41
    $region40: #{network_forward.1} parent=1 // pred_region
      _
    $region41: #{network_forward.1} parent=1 // pred_fallthru
      _
    %239 = vsyncpa [#allocation3], 1
    %240 = vsyncpa [#allocation5], 1

</llo_original>
